<compile_context>
chip_gen: v7x
topology: tpu7x:2x2x1
jax: 0.10.0
libtpu: 0.0.40
codegen_flags: <defaults>
</compile_context>

<pallas_src>
import functools

import jax
import jax.numpy as jnp
from jax.experimental import pallas as pl
from jax.experimental.pallas import tpu as pltpu


def ffn_kernel(x_ref, w1_ref, b1_ref, w2_ref, b2_ref, o_ref, *,
               ew_dtype, gelu_approximate):
    # x_ref : (1, C, tt)  channels-major activation tile (tokens on the lane axis)
    # w1_ref: (H, C)      b1_ref: (H, 1) f32
    # w2_ref: (C, H)      b2_ref: (C, 1) f32
    # o_ref : (1, C, tt)
    x = x_ref[0].astype(w1_ref.dtype)                                   # (C, tt)
    h = jnp.dot(w1_ref[...], x, preferred_element_type=jnp.float32)     # (H, tt) f32 acc (MXU)

    # Element-wise phase (bias + GELU) in ew_dtype:
    #   bf16 on v6e/v7x (bf16 VPU/EUP -> half the VALU bundles), f32 on v5e.
    h = h.astype(ew_dtype) + b1_ref[...].astype(ew_dtype)
    # tanh-form GELU: ~3x fewer VALU ops than the exact-erf polynomial and the
    # transcendental goes to the EUP slot (free co-issue).  Set
    # gelu_approximate=False for exact parity with nn.GELU()'s erf default.
    h = jax.nn.gelu(h, approximate=gelu_approximate)

    y = jnp.dot(w2_ref[...], h.astype(w2_ref.dtype),
                preferred_element_type=jnp.float32)                     # (C, tt) f32 acc (MXU)
    y = y + b2_ref[...]
    o_ref[0] = y.astype(o_ref.dtype)


def _default_elementwise_dtype():
    # bf16 VPU/EUP exists on v6e / v7x; v5e (and older) must keep f32 element-wise math.
    try:
        kind = jax.devices()[0].device_kind.lower()
    except Exception:
        return jnp.float32
    return jnp.bfloat16 if ("v6" in kind or "v7" in kind) else jnp.float32


def ffn_pallas(x_nct, w1_hc, b1_h, w2_ch, b2_c, *,
               tt=1024,
               matmul_dtype=jnp.bfloat16,       # f32 escape hatch for parity-sensitive use
               elementwise_dtype=None,          # None -> auto per chip (bf16 on v6e/v7x, f32 on v5e)
               gelu_approximate=True,           # False -> exact erf (PyTorch nn.GELU default)
               min_grid_steps=8,                # >=4 steps per TensorCore on v7x
               single_buffer_weights=False):    # pl.Buffered(1) on resident weights (large C/H, v7x)
    """Fused FFN. x_nct: (B, C, T) -> (B, C, T). Dropout(p=0) is identity.

    w1_hc: (H, C) == Conv1d(C, H, 1).weight.squeeze(-1),  b1_h: (H,)
    w2_ch: (C, H) == Conv1d(H, C, 1).weight.squeeze(-1),  b2_c: (C,)

    For v5e-bandwidth-bound cases, feed bf16 activations: the output dtype follows the
    input dtype, so no extra wrapper cast pass is introduced.
    """
    B, C, T = x_nct.shape
    H = w1_hc.shape[0]
    if elementwise_dtype is None:
        elementwise_dtype = _default_elementwise_dtype()

    # Token tile: multiple of 128 (lane-dense stores).  Clamp to the 128-rounded sequence
    # length so short T doesn't over-allocate, then shrink until the grid has enough
    # steps to (a) feed both v7x TensorCores and (b) give the pipeline iterations to
    # overlap DMA behind compute.  No wrapper pad: the ragged last tile is masked.
    tt = max(128, (int(tt) // 128) * 128)
    tt = min(tt, pl.cdiv(T, 128) * 128)
    while tt > 128 and B * pl.cdiv(T, tt) < min_grid_steps:
        tt = max(128, ((tt // 2) // 128) * 128)
    n_t = pl.cdiv(T, tt)
    grid = (B, n_t)

    # Matmul operands in bf16 (f32 accumulation inside the kernel); biases stay f32.
    w1 = w1_hc.astype(matmul_dtype)
    w2 = w2_ch.astype(matmul_dtype)
    b1 = b1_h.astype(jnp.float32).reshape(H, 1)
    b2 = b2_c.astype(jnp.float32).reshape(C, 1)

    # Resident (constant-index_map) weights.  pl.Buffered(1) halves their VMEM footprint
    # (matters at production C/H on v7x's 64 MiB VMEM); default off at small C.
    w_mode = dict(pipeline_mode=pl.Buffered(1)) if single_buffer_weights else {}

    # Explicit VMEM budget: rough per-step footprint with headroom, capped at 64 MiB
    # (v7x physical per-TC VMEM) so the same limit is safe on every generation.
    act_bytes = x_nct.dtype.itemsize
    mm_bytes = jnp.dtype(matmul_dtype).itemsize
    vmem_est = (2 * 2 * C * tt * act_bytes                            # x/out tiles, double-buffered
                + (1 if single_buffer_weights else 2) * 2 * H * C * mm_bytes  # W1 + W2 buffers
                + H * tt * 4 + C * tt * 4                             # f32 intermediates
                + (1 << 20))
    vmem_limit = int(min(max(2 * vmem_est, 32 << 20), 64 << 20))

    kernel = functools.partial(ffn_kernel, ew_dtype=elementwise_dtype,
                               gelu_approximate=gelu_approximate)

    return pl.pallas_call(
        kernel,
        out_shape=jax.ShapeDtypeStruct((B, C, T), x_nct.dtype),
        grid_spec=pltpu.PrefetchScalarGridSpec(
            num_scalar_prefetch=0,
            grid=grid,
            in_specs=[
                pl.BlockSpec((1, C, tt), lambda b, i: (b, 0, i)),          # x tile (channels-major)
                pl.BlockSpec((H, C), lambda b, i: (0, 0), **w_mode),       # W1 (resident)
                pl.BlockSpec((H, 1), lambda b, i: (0, 0), **w_mode),       # b1
                pl.BlockSpec((C, H), lambda b, i: (0, 0), **w_mode),       # W2 (resident)
                pl.BlockSpec((C, 1), lambda b, i: (0, 0), **w_mode),       # b2
            ],
            out_specs=pl.BlockSpec((1, C, tt), lambda b, i: (b, 0, i)),
        ),
        compiler_params=pltpu.CompilerParams(
            dimension_semantics=("parallel", "parallel"),
            vmem_limit_bytes=vmem_limit),
    )(x_nct, w1, b1, w2, b2)


def ffn_reference(x_nct, w1_hc, b1_h, w2_ch, b2_c):
    """Plain-JAX f32 reference matching the PyTorch FFN forward (exact-erf GELU)."""
    h = jnp.einsum('hc,bct->bht', w1_hc, x_nct) + b1_h[None, :, None]
    h = jax.nn.gelu(h, approximate=False)
    y = jnp.einsum('ch,bht->bct', w2_ch, h) + b2_c[None, :, None]
    return y


if __name__ == "__main__":
    # Small shapes consistent with the module: channels=32, expansion=4 -> H=128.
    # T=200 deliberately not a multiple of 128 to exercise the masked-ragged-tile path.
    B, C, T, E = 2, 32, 200, 4
    H = C * E

    key = jax.random.PRNGKey(0)
    kx, k1, kb1, k2, kb2 = jax.random.split(key, 5)

    x = jax.random.normal(kx, (B, C, T), dtype=jnp.float32)
    # Conv1d(C, H, 1).weight has shape (H, C, 1) -> stored squeezed as (H, C).
    w1 = jax.random.normal(k1, (H, C), dtype=jnp.float32) * 0.05
    b1 = jax.random.normal(kb1, (H,), dtype=jnp.float32) * 0.05
    w2 = jax.random.normal(k2, (C, H), dtype=jnp.float32) * 0.05
    b2 = jax.random.normal(kb2, (C,), dtype=jnp.float32) * 0.05

    out = ffn_pallas(x, w1, b1, w2, b2)
    out = jax.block_until_ready(out)

    ref = ffn_reference(x, w1, b1, w2, b2)
    assert out.shape == (B, C, T)
    # bf16 matmul operands + tanh-GELU (+ bf16 element-wise on v6e/v7x) vs the exact f32
    # reference -> loosened tolerance (deviation is ~1e-3, well within 2e-2).
    assert jnp.allclose(out, ref, atol=2e-2, rtol=2e-2), "mismatch vs reference"

    print("KERNEL_OK")
</pallas_src>

<mosaic_0001>
module attributes {stable_mosaic.version = 11 : i64} {
  func.func @ffn_kernel(%arg0: i32, %arg1: i32, %arg2: memref<1x32x128xf32, #tpu.memory_space<vmem>>, %arg3: memref<128x32xbf16, #tpu.memory_space<vmem>>, %arg4: memref<128x1xf32, #tpu.memory_space<vmem>>, %arg5: memref<32x128xbf16, #tpu.memory_space<vmem>>, %arg6: memref<32x1xf32, #tpu.memory_space<vmem>>, %arg7: memref<1x32x128xf32, #tpu.memory_space<vmem>>) attributes {dimension_semantics = [#tpu.dimension_semantics<parallel>, #tpu.dimension_semantics<parallel>], iteration_bounds = array<i64: 2, 2>, scalar_prefetch = 0 : i64, scratch_operands = 0 : i64, tpu.core_type = #tpu.core_type<tc>, window_params = [{transform_indices = @transform_0, window_bounds = array<i64: 1, 32, 128>}, {pipeline_mode = #tpu.pipeline_mode<synchronous>, transform_indices = @transform_1, window_bounds = array<i64: 128, 32>}, {pipeline_mode = #tpu.pipeline_mode<synchronous>, transform_indices = @transform_2, window_bounds = array<i64: 128, 1>}, {pipeline_mode = #tpu.pipeline_mode<synchronous>, transform_indices = @transform_3, window_bounds = array<i64: 32, 128>}, {pipeline_mode = #tpu.pipeline_mode<synchronous>, transform_indices = @transform_4, window_bounds = array<i64: 32, 1>}, {transform_indices = @transform_5, window_bounds = array<i64: 1, 32, 128>}]} {
    %c0 = arith.constant 0 : index
    %c0_0 = arith.constant 0 : index
    %c0_1 = arith.constant 0 : index
    %0 = vector.load %arg2[%c0, %c0_0, %c0_1] : memref<1x32x128xf32, #tpu.memory_space<vmem>>, vector<1x32x128xf32>
    %1 = vector.shape_cast %0 : vector<1x32x128xf32> to vector<32x128xf32>
    %2 = arith.truncf %1 : vector<32x128xf32> to vector<32x128xbf16>
    %c0_2 = arith.constant 0 : index
    %c0_3 = arith.constant 0 : index
    %3 = vector.load %arg3[%c0_2, %c0_3] : memref<128x32xbf16, #tpu.memory_space<vmem>>, vector<128x32xbf16>
    %cst = arith.constant dense<0.000000e+00> : vector<128x128xf32>
    %4 = tpu.matmul %3, %2, %cst {dimension_numbers = #tpu.dot_dimension_numbers<[1], [0], [0], [1], [0, 0, 1, 1], [], []>} : vector<128x32xbf16>, vector<32x128xbf16>, vector<128x128xf32> -> vector<128x128xf32>
    %c0_4 = arith.constant 0 : index
    %c0_5 = arith.constant 0 : index
    %5 = vector.load %arg4[%c0_4, %c0_5] : memref<128x1xf32, #tpu.memory_space<vmem>>, vector<128x1xf32>
    %6 = vector.broadcast %5 : vector<128x1xf32> to vector<128x128xf32>
    %7 = arith.addf %4, %6 : vector<128x128xf32>
    %8 = arith.mulf %7, %7 : vector<128x128xf32>
    %9 = arith.mulf %7, %8 : vector<128x128xf32>
    %cst_6 = arith.constant 4.471500e-02 : f32
    %10 = vector.broadcast %cst_6 : f32 to vector<128x128xf32>
    %11 = arith.mulf %10, %9 : vector<128x128xf32>
    %12 = arith.addf %7, %11 : vector<128x128xf32>
    %cst_7 = arith.constant 0.797884583 : f32
    %13 = vector.broadcast %cst_7 : f32 to vector<128x128xf32>
    %14 = arith.mulf %13, %12 : vector<128x128xf32>
    %15 = math.tanh %14 : vector<128x128xf32>
    %cst_8 = arith.constant 1.000000e+00 : f32
    %16 = vector.broadcast %cst_8 : f32 to vector<128x128xf32>
    %17 = arith.addf %16, %15 : vector<128x128xf32>
    %cst_9 = arith.constant 5.000000e-01 : f32
    %18 = vector.broadcast %cst_9 : f32 to vector<128x128xf32>
    %19 = arith.mulf %18, %17 : vector<128x128xf32>
    %20 = arith.mulf %7, %19 : vector<128x128xf32>
    %c0_10 = arith.constant 0 : index
    %c0_11 = arith.constant 0 : index
    %21 = vector.load %arg5[%c0_10, %c0_11] : memref<32x128xbf16, #tpu.memory_space<vmem>>, vector<32x128xbf16>
    %22 = arith.truncf %20 : vector<128x128xf32> to vector<128x128xbf16>
    %cst_12 = arith.constant dense<0.000000e+00> : vector<32x128xf32>
    %23 = tpu.matmul %21, %22, %cst_12 {dimension_numbers = #tpu.dot_dimension_numbers<[1], [0], [0], [1], [0, 0, 1, 1], [], []>} : vector<32x128xbf16>, vector<128x128xbf16>, vector<32x128xf32> -> vector<32x128xf32>
    %c0_13 = arith.constant 0 : index
    %c0_14 = arith.constant 0 : index
    %24 = vector.load %arg6[%c0_13, %c0_14] : memref<32x1xf32, #tpu.memory_space<vmem>>, vector<32x1xf32>
    %25 = vector.broadcast %24 : vector<32x1xf32> to vector<32x128xf32>
    %26 = arith.addf %23, %25 : vector<32x128xf32>
    %c0_15 = arith.constant 0 : index
    %c0_16 = arith.constant 0 : index
    %c0_17 = arith.constant 0 : index
    %27 = vector.load %arg7[%c0_15, %c0_16, %c0_17] : memref<1x32x128xf32, #tpu.memory_space<vmem>>, vector<1x32x128xf32>
    %28 = vector.shape_cast %27 : vector<1x32x128xf32> to vector<32x128xf32>
    %29 = vector.shape_cast %26 : vector<32x128xf32> to vector<1x32x128xf32>
    tpu.vector_store %arg7[%c0_15, %c0_16, %c0_17], %29 {strides = array<i32>} : memref<1x32x128xf32, #tpu.memory_space<vmem>>, vector<1x32x128xf32>,
    return
  }
  func.func @transform_0(%arg0: i32, %arg1: i32) -> (i32, i32, i32) {
    %c0_i32 = arith.constant 0 : i32
    %c0_i32_0 = arith.constant 0 : i32
    return %arg0, %c0_i32, %arg1 : i32, i32, i32
  }
  func.func @transform_1(%arg0: i32, %arg1: i32) -> (i32, i32) {
    %c0_i32 = arith.constant 0 : i32
    %c0_i32_0 = arith.constant 0 : i32
    %c0_i32_1 = arith.constant 0 : i32
    return %c0_i32, %c0_i32_0 : i32, i32
  }
  func.func @transform_2(%arg0: i32, %arg1: i32) -> (i32, i32) {
    %c0_i32 = arith.constant 0 : i32
    %c0_i32_0 = arith.constant 0 : i32
    %c0_i32_1 = arith.constant 0 : i32
    return %c0_i32, %c0_i32_0 : i32, i32
  }
  func.func @transform_3(%arg0: i32, %arg1: i32) -> (i32, i32) {
    %c0_i32 = arith.constant 0 : i32
    %c0_i32_0 = arith.constant 0 : i32
    %c0_i32_1 = arith.constant 0 : i32
    return %c0_i32, %c0_i32_0 : i32, i32
  }
  func.func @transform_4(%arg0: i32, %arg1: i32) -> (i32, i32) {
    %c0_i32 = arith.constant 0 : i32
    %c0_i32_0 = arith.constant 0 : i32
    %c0_i32_1 = arith.constant 0 : i32
    return %c0_i32, %c0_i32_0 : i32, i32
  }
  func.func @transform_5(%arg0: i32, %arg1: i32) -> (i32, i32, i32) {
    %c0_i32 = arith.constant 0 : i32
    %c0_i32_0 = arith.constant 0 : i32
    return %arg0, %c0_i32, %arg1 : i32, i32, i32
  }
}

</mosaic_0001>

<llo_original>
// kernel: tpu_custom_call.1
$region0: #{tpu_custom_call.1}
  #allocation0 [shape = 'u32[]', space=smem, size = 0x4, offset = 0x4, fixed_abs, tag = 'smem constant byte address 0x4 - core index']
  #allocation1 [shape = 'u32[144,128]{1,0:T(1,128)}', space=vmem, size = 0x12000, scoped, tag = 'internal scratch']
  %s0 = inlined_call_operand.vmem [shape: f32[2,32,200], index: 0, kind: input, shape index: {}]
  %s1 = inlined_call_operand.vmem [shape: bf16[128,32], index: 1, kind: input, shape index: {}]
  %s2 = inlined_call_operand.vmem [shape: f32[128,1], index: 2, kind: input, shape index: {}]
  %s3 = inlined_call_operand.vmem [shape: bf16[32,128], index: 3, kind: input, shape index: {}]
  %s4 = inlined_call_operand.vmem [shape: f32[32,1], index: 4, kind: input, shape index: {}]
  %s5 = inlined_call_operand.hbm [shape: f32[2,32,200], index: 5, kind: output, shape index: {}]
  %s6 = sld [smem:[#allocation0]]
  $region91: #{tpu_custom_call.1} parent=0
    _
  %s8 = ssub.s32 1, %s6
  %s9 = scalar_select 0, %s8, %s6
  $region1: #{tpu_custom_call.1} parent=0
    #allocation2 [shape = 'u8[32768]{0}', space=vmem, size = 0x8000, scoped, tag = 'input window, operand 0']
    #allocation3 [shape = 'u8[32768]{0}', space=vmem, size = 0x8000, scoped, tag = 'output window, operand 0']
    #allocation4 [shape = 's32[2]{0}', space=sflag, size = 0x8, scoped, tag = 'scoped memory for tpu_custom_call.1']
    %10 = vsyncpa [#allocation4], 0
    %s11 = scalar_lea.sflag [#allocation4], 1
    %12 = vsyncpa %s11, 0
    loop: start=0, step=1, limit=6
    $region2: #{tpu_custom_call.1} parent=1 // loop_pre_header
      _
    $region3: #{tpu_custom_call.1} parent=1 // loop_header
      %s14 = sphi 0, %s18
      %p15 = scmp.ge.s32.totalorder %s14, 6
      %s21 = sphi 0, %s33
      %s22 = sphi 0, %s29
      %s23 = sphi 0, %s21
      %s24 = sphi 0, %s22
      %s25 = sphi 0, %s23
      %s26 = sphi 0, %s24
      %s38 = sphi 0, %s40
      %s41 = sphi 0, %s38
      %s42 = sphi 0, %s41
      %s58 = sphi 0, %s42
      %s62 = sphi 0, %s62
      %s64 = sphi 0, %s62
      %s65 = sphi 0, %s64
      %s79 = sphi 0, %s65
      %s83 = sphi 0, %s83
      %s85 = sphi 0, %s83
      %s86 = sphi 0, %s85
      %s100 = sphi 0, %s86
      %s104 = sphi 0, %s104
      %s106 = sphi 0, %s104
      %s107 = sphi 0, %s106
      %s121 = sphi 0, %s107
      %s125 = sphi 0, %s125
      %s127 = sphi 0, %s125
      %s128 = sphi 0, %s127
      %s142 = sphi 0, %s128
      %s150 = sphi 0, %s152
      %s153 = sphi 0, %s150
      %s154 = sphi 0, %s153
      %s170 = sphi 0, %s154
    $region4: #{tpu_custom_call.1} parent=1 // loop_header_branch
      %17 = sbr.rel (%p15) target = $region8
    $region5: #{tpu_custom_call.1} parent=1 // loop_body
      %s19 = ssub.s32 %s14, 1
      %s20 = ssub.s32 %s14, 2
      %s27 = sadd.s32 1, %s22
      %p28 = scmp.ge.s32.totalorder %s27, 2
      %s29 = scalar_select %p28, 0, %s27
      %s30 = sadd.s32 1, %s21
      %s31 = scalar_select %p28, %s30, %s21
      %p32 = scmp.ge.s32.totalorder %s31, 2
      %s33 = scalar_select %p32, 0, %s31
      %s34 = ssub.s32 %s21, %s33
      %s35 = ssub.s32 %s22, %s29
      %s36 = sor.u32 %s34, %s35
      %p37 = scmp.eq.s32.totalorder %s36, 0
      %s39 = sadd.s32 %s38, 1
      %s40 = scalar_select %p37, %s38, %s39
      %p43 = pneg %p37
      %p44 = scmp.eq.s32.totalorder %s14, 3
      %p45 = por %p43, %p44
      %p46 = scmp.ne.s32.totalorder %s38, %s41
      %p47 = scmp.eq.s32.totalorder %s14, 0
      %p48 = por %p46, %p47
      %p49 = scmp.ne.s32.totalorder %s38, %s41
      %p50 = scmp.eq.s32.totalorder %s19, 3
      %p51 = por %p49, %p50
      %p52 = scmp.ne.s32.totalorder %s41, %s42
      %p53 = scmp.eq.s32.totalorder %s19, 0
      %p54 = por %p52, %p53
      %p55 = scmp.ne.s32.totalorder %s41, %s42
      %p56 = scmp.eq.s32.totalorder %s20, 3
      %p57 = por %p55, %p56
      %p59 = scmp.ne.s32.totalorder %s42, %s58
      %p60 = scmp.eq.s32.totalorder %s20, 0
      %p61 = por %p59, %p60
      %s63 = sadd.s32 %s62, 1
      %p66 = scmp.eq.s32.totalorder %s14, 3
      %p67 = scmp.ne.s32.totalorder %s62, %s64
      %p68 = scmp.eq.s32.totalorder %s14, 0
      %p69 = por %p67, %p68
      %p70 = scmp.ne.s32.totalorder %s62, %s64
      %p71 = scmp.eq.s32.totalorder %s19, 3
      %p72 = por %p70, %p71
      %p73 = scmp.ne.s32.totalorder %s64, %s65
      %p74 = scmp.eq.s32.totalorder %s19, 0
      %p75 = por %p73, %p74
      %p76 = scmp.ne.s32.totalorder %s64, %s65
      %p77 = scmp.eq.s32.totalorder %s20, 3
      %p78 = por %p76, %p77
      %p80 = scmp.ne.s32.totalorder %s65, %s79
      %p81 = scmp.eq.s32.totalorder %s20, 0
      %p82 = por %p80, %p81
      %s84 = sadd.s32 %s83, 1
      %p87 = scmp.eq.s32.totalorder %s14, 3
      %p88 = scmp.ne.s32.totalorder %s83, %s85
      %p89 = scmp.eq.s32.totalorder %s14, 0
      %p90 = por %p88, %p89
      %p91 = scmp.ne.s32.totalorder %s83, %s85
      %p92 = scmp.eq.s32.totalorder %s19, 3
      %p93 = por %p91, %p92
      %p94 = scmp.ne.s32.totalorder %s85, %s86
      %p95 = scmp.eq.s32.totalorder %s19, 0
      %p96 = por %p94, %p95
      %p97 = scmp.ne.s32.totalorder %s85, %s86
      %p98 = scmp.eq.s32.totalorder %s20, 3
      %p99 = por %p97, %p98
      %p101 = scmp.ne.s32.totalorder %s86, %s100
      %p102 = scmp.eq.s32.totalorder %s20, 0
      %p103 = por %p101, %p102
      %s105 = sadd.s32 %s104, 1
      %p108 = scmp.eq.s32.totalorder %s14, 3
      %p109 = scmp.ne.s32.totalorder %s104, %s106
      %p110 = scmp.eq.s32.totalorder %s14, 0
      %p111 = por %p109, %p110
      %p112 = scmp.ne.s32.totalorder %s104, %s106
      %p113 = scmp.eq.s32.totalorder %s19, 3
      %p114 = por %p112, %p113
      %p115 = scmp.ne.s32.totalorder %s106, %s107
      %p116 = scmp.eq.s32.totalorder %s19, 0
      %p117 = por %p115, %p116
      %p118 = scmp.ne.s32.totalorder %s106, %s107
      %p119 = scmp.eq.s32.totalorder %s20, 3
      %p120 = por %p118, %p119
      %p122 = scmp.ne.s32.totalorder %s107, %s121
      %p123 = scmp.eq.s32.totalorder %s20, 0
      %p124 = por %p122, %p123
      %s126 = sadd.s32 %s125, 1
      %p129 = scmp.eq.s32.totalorder %s14, 3
      %p130 = scmp.ne.s32.totalorder %s125, %s127
      %p131 = scmp.eq.s32.totalorder %s14, 0
      %p132 = por %p130, %p131
      %p133 = scmp.ne.s32.totalorder %s125, %s127
      %p134 = scmp.eq.s32.totalorder %s19, 3
      %p135 = por %p133, %p134
      %p136 = scmp.ne.s32.totalorder %s127, %s128
      %p137 = scmp.eq.s32.totalorder %s19, 0
      %p138 = por %p136, %p137
      %p139 = scmp.ne.s32.totalorder %s127, %s128
      %p140 = scmp.eq.s32.totalorder %s20, 3
      %p141 = por %p139, %p140
      %p143 = scmp.ne.s32.totalorder %s128, %s142
      %p144 = scmp.eq.s32.totalorder %s20, 0
      %p145 = por %p143, %p144
      %s146 = ssub.s32 %s21, %s33
      %s147 = ssub.s32 %s22, %s29
      %s148 = sor.u32 %s146, %s147
      %p149 = scmp.eq.s32.totalorder %s148, 0
      %s151 = sadd.s32 %s150, 1
      %s152 = scalar_select %p149, %s150, %s151
      %p155 = pneg %p149
      %p156 = scmp.eq.s32.totalorder %s14, 3
      %p157 = por %p155, %p156
      %p158 = scmp.ne.s32.totalorder %s150, %s153
      %p159 = scmp.eq.s32.totalorder %s14, 0
      %p160 = por %p158, %p159
      %p161 = scmp.ne.s32.totalorder %s150, %s153
      %p162 = scmp.eq.s32.totalorder %s19, 3
      %p163 = por %p161, %p162
      %p164 = scmp.ne.s32.totalorder %s153, %s154
      %p165 = scmp.eq.s32.totalorder %s19, 0
      %p166 = por %p164, %p165
      %p167 = scmp.ne.s32.totalorder %s153, %s154
      %p168 = scmp.eq.s32.totalorder %s20, 3
      %p169 = por %p167, %p168
      %p171 = scmp.ne.s32.totalorder %s154, %s170
      %p172 = scmp.eq.s32.totalorder %s20, 0
      %p173 = por %p171, %p172
      %p174 = scmp.le.s32.totalorder 1, %s14
      %p175 = scmp.lt.s32.totalorder %s14, 5
      %p176 = pnand %p174, %p175
      %p177 = pneg %p176
      // Predicated region
      $region9: #{tpu_custom_call.1} parent=5 // pred_check
        _
      $region10: #{tpu_custom_call.1} parent=5 // pred_check_branch
        %179 = sbr.rel (%p176) target = $region12
      $region11: #{tpu_custom_call.1} parent=5 // pred_region
        %s180 = ssub.s32 %s14, 1
        // Predicated region
        $region13: #{tpu_custom_call.1} parent=11 // pred_check
          %p181 = pneg %p75
        $region14: #{tpu_custom_call.1} parent=11 // pred_check_branch
          %183 = sbr.rel (%p181) target = $region16
        $region15: #{tpu_custom_call.1} parent=11 // pred_region
          _
        $region16: #{tpu_custom_call.1} parent=11 // pred_fallthru
          _
        // Predicated region
        $region17: #{tpu_custom_call.1} parent=11 // pred_check
          %p184 = pneg %p96
        $region18: #{tpu_custom_call.1} parent=11 // pred_check_branch
          %186 = sbr.rel (%p184) target = $region20
        $region19: #{tpu_custom_call.1} parent=11 // pred_region
          _
        $region20: #{tpu_custom_call.1} parent=11 // pred_fallthru
          _
        // Predicated region
        $region21: #{tpu_custom_call.1} parent=11 // pred_check
          %p187 = pneg %p117
        $region22: #{tpu_custom_call.1} parent=11 // pred_check_branch
          %189 = sbr.rel (%p187) target = $region24
        $region23: #{tpu_custom_call.1} parent=11 // pred_region
          _
        $region24: #{tpu_custom_call.1} parent=11 // pred_fallthru
          _
        // Predicated region
        $region25: #{tpu_custom_call.1} parent=11 // pred_check
          %p190 = pneg %p138
        $region26: #{tpu_custom_call.1} parent=11 // pred_check_branch
          %192 = sbr.rel (%p190) target = $region28
        $region27: #{tpu_custom_call.1} parent=11 // pred_region
          _
        $region28: #{tpu_custom_call.1} parent=11 // pred_fallthru
          _
      $region12: #{tpu_custom_call.1} parent=5 // pred_fallthru
        _
      %p193 = scmp.lt.s32.totalorder %s14, 4
      // Predicated region
      $region29: #{tpu_custom_call.1} parent=5 // pred_check
        %p194 = pneg %p193
      $region30: #{tpu_custom_call.1} parent=5 // pred_check_branch
        %196 = sbr.rel (%p194) target = $region32
      $region31: #{tpu_custom_call.1} parent=5 // pred_region
        // Predicated region
        $region33: #{tpu_custom_call.1} parent=31 // pred_check
          %p197 = pneg %p48
        $region34: #{tpu_custom_call.1} parent=31 // pred_check_branch
          %199 = sbr.rel (%p197) target = $region36
        $region35: #{tpu_custom_call.1} parent=31 // pred_region
          %s200 = sand.u32 %s38, 1
          %s201 = sand.u32 %s38, 1
          %s202 = smul.addr %s201, 32
          %s203 = scalar_lea.vmem [#allocation2], %s202
          %s204 = smul.addr %s21, 8
          %s205 = sadd.s32 %s22, %s204
          %s206 = smul.addr %s205, 8
          %s207 = scalar_lea.vmem %s0, %s206
          // Predicated region
          $region37: #{tpu_custom_call.1} parent=35 // pred_check
            _
          $region38: #{tpu_custom_call.1} parent=35 // pred_check_branch
            %209 = sbr.rel (0) target = $region40
          $region39: #{tpu_custom_call.1} parent=35 // pred_region
            // Predicated region
            $region41: #{tpu_custom_call.1} parent=39 // pred_check
              _
            $region42: #{tpu_custom_call.1} parent=39 // pred_check_branch
              %211 = sbr.rel (0) target = $region44
            $region43: #{tpu_custom_call.1} parent=39 // pred_region
              // Predicated region
              $region56: #{tpu_custom_call.1} parent=43 // pred_check
                _
              $region57: #{tpu_custom_call.1} parent=43 // pred_check_branch
                %232 = sbr.rel (0) target = $region59
              $region58: #{tpu_custom_call.1} parent=43 // pred_region
                loop: start=0, step=1, limit=1
                $region60: #{tpu_custom_call.1} parent=58 // loop_pre_header
                  _
                $region61: #{tpu_custom_call.1} parent=58 // loop_header
                  %s234 = sphi 0, %s238
                  %p235 = scmp.ge.s32.totalorder %s234, 1
                  %s239 = sphi %s207, %s207
                  %s240 = sphi %s203, %s203
                $region62: #{tpu_custom_call.1} parent=58 // loop_header_branch
                  %237 = sbr.rel (%p235) target = $region66
                $region63: #{tpu_custom_call.1} parent=58 // loop_body
                  %v241 = vld [vmem:[%s239] sm:$0xff]
                  %242 = vst [vmem:[%s240] sm:$0xff] %v241
                  %v243 = vld [vmem:[%s239 + $0x10] sm:$0xff]
                  %244 = vst [vmem:[%s240 + $0x8] sm:$0xff] %v243
                  %v245 = vld [vmem:[%s239 + $0x20] sm:$0xff]
                  %246 = vst [vmem:[%s240 + $0x10] sm:$0xff] %v245
                  %v247 = vld [vmem:[%s239 + $0x30] sm:$0xff]
                  %248 = vst [vmem:[%s240 + $0x18] sm:$0xff] %v247
                $region64: #{tpu_custom_call.1} parent=58 // loop_footer
                  %s238 = sadd.s32 1, %s234
                $region65: #{tpu_custom_call.1} parent=58 // loop_footer_branch
                  %233 = sbr.rel target = $region61
                $region66: #{tpu_custom_call.1} parent=58 // loop_exit
                  _
              $region59: #{tpu_custom_call.1} parent=43 // pred_fallthru
                _
              // Predicated region
              $region67: #{tpu_custom_call.1} parent=43 // pred_check
                _
              $region68: #{tpu_custom_call.1} parent=43 // pred_check_branch
                %250 = sbr.rel target = $region70
              $region69: #{tpu_custom_call.1} parent=43 // pred_region
                _
              $region70: #{tpu_custom_call.1} parent=43 // pred_fallthru
                _
            $region44: #{tpu_custom_call.1} parent=39 // pred_fallthru
              _
            // Predicated region
            $region45: #{tpu_custom_call.1} parent=39 // pred_check
              _
            $region46: #{tpu_custom_call.1} parent=39 // pred_check_branch
              %213 = sbr.rel target = $region48
            $region47: #{tpu_custom_call.1} parent=39 // pred_region
              loop: start=0, step=1, limit=1
              $region49: #{tpu_custom_call.1} parent=47 // loop_pre_header
                _
              $region50: #{tpu_custom_call.1} parent=47 // loop_header
                %s216 = sphi 0, %s220
                %p217 = scmp.ge.s32.totalorder %s216, 1
                %s221 = sphi %s207, %s207
                %s222 = sphi %s203, %s203
              $region51: #{tpu_custom_call.1} parent=47 // loop_header_branch
                %219 = sbr.rel (%p217) target = $region55
              $region52: #{tpu_custom_call.1} parent=47 // loop_body
                %v223 = vld [vmem:[%s221] sm:$0xff]
                %224 = vst [vmem:[%s222] sm:$0xff] %v223
                %v225 = vld [vmem:[%s221 + $0x10] sm:$0xff]
                %226 = vst [vmem:[%s222 + $0x8] sm:$0xff] %v225
                %v227 = vld [vmem:[%s221 + $0x20] sm:$0xff]
                %228 = vst [vmem:[%s222 + $0x10] sm:$0xff] %v227
                %v229 = vld [vmem:[%s221 + $0x30] sm:$0xff]
                %230 = vst [vmem:[%s222 + $0x18] sm:$0xff] %v229
              $region53: #{tpu_custom_call.1} parent=47 // loop_footer
                %s220 = sadd.s32 1, %s216
              $region54: #{tpu_custom_call.1} parent=47 // loop_footer_branch
                %215 = sbr.rel target = $region50
              $region55: #{tpu_custom_call.1} parent=47 // loop_exit
                _
            $region48: #{tpu_custom_call.1} parent=39 // pred_fallthru
              _
          $region40: #{tpu_custom_call.1} parent=35 // pred_fallthru
            _
          %251 = vnop
        $region36: #{tpu_custom_call.1} parent=31 // pred_fallthru
          _
      $region32: #{tpu_custom_call.1} parent=5 // pred_fallthru
        _
      %p252 = scmp.le.s32.totalorder 1, %s14
      %p253 = scmp.lt.s32.totalorder %s14, 5
      %p254 = pnand %p252, %p253
      %p255 = pneg %p254
      // Predicated region
      $region71: #{tpu_custom_call.1} parent=5 // pred_check
        _
      $region72: #{tpu_custom_call.1} parent=5 // pred_check_branch
        %257 = sbr.rel (%p254) target = $region74
      $region73: #{tpu_custom_call.1} parent=5 // pred_region
        %s258 = ssub.s32 %s14, 1
        %s259 = sand.u32 %s41, 1
        %s260 = sand.u32 %s41, 1
        %s261 = smul.addr %s260, 32
        %s262 = scalar_lea.vmem [#allocation2], %s261
        // Predicated region
        $region75: #{tpu_custom_call.1} parent=73 // pred_check
          %p263 = pneg %p54
        $region76: #{tpu_custom_call.1} parent=73 // pred_check_branch
          %265 = sbr.rel (%p263) target = $region78
        $region77: #{tpu_custom_call.1} parent=73 // pred_region
          _
        $region78: #{tpu_custom_call.1} parent=73 // pred_fallthru
          _
        %s266 = sand.u32 %s41, 1
        %s267 = sand.u32 %s41, 1
        %s268 = smul.addr %s267, 32
        %s269 = scalar_lea.vmem [#allocation2], %s268
        %p270 = pneg %p54
        %p271 = pneg %p51
        %p272 = pneg %p75
        %p273 = pneg %p72
        %p274 = pneg %p96
        %p275 = pneg %p93
        %p276 = pneg %p117
        %p277 = pneg %p114
        %p278 = pneg %p138
        %p279 = pneg %p135
        %p280 = pneg %p166
        %p281 = pneg %p163
        %s282 = sand.u32 %s153, 1
        %s283 = scalar_lea.sflag [#allocation4], %s282
        %s284 = sand.u32 %s153, 1
        %s285 = smul.addr %s284, 32
        %s286 = scalar_lea.vmem [#allocation3], %s285
        %v288 = vld [vmem:[%s262] sm:$0xff]
        %v289 = vld [vmem:[%s262 + $0x8] sm:$0xff]
        %v290 = vld [vmem:[%s262 + $0x10] sm:$0xff]
        %v291 = vld [vmem:[%s262 + $0x18] sm:$0xff]
        %v292 = vpack.c.bf16 %v289, %v288
        %v293 = vpack.c.bf16 %v291, %v290
        %v294 = vld [vmem:[%s1] sm:$0xf]
        %v295 = vld [vmem:[%s1 + $0x4] sm:$0xf]
        %v296 = vld [vmem:[%s1 + $0x8] sm:$0xf]
        %v297 = vld [vmem:[%s1 + $0xc] sm:$0xf]
        %v298 = vld [vmem:[%s1 + $0x10] sm:$0xf]
        %v299 = vld [vmem:[%s1 + $0x14] sm:$0xf]
        %v300 = vld [vmem:[%s1 + $0x18] sm:$0xf]
        %v301 = vld [vmem:[%s1 + $0x1c] sm:$0xf]
        %v302 = vld [vmem:[%s1 + $0x20] sm:$0xf]
        %v303 = vld [vmem:[%s1 + $0x24] sm:$0xf]
        %v304 = vld [vmem:[%s1 + $0x28] sm:$0xf]
        %v305 = vld [vmem:[%s1 + $0x2c] sm:$0xf]
        %v306 = vld [vmem:[%s1 + $0x30] sm:$0xf]
        %v307 = vld [vmem:[%s1 + $0x34] sm:$0xf]
        %v308 = vld [vmem:[%s1 + $0x38] sm:$0xf]
        %v309 = vld [vmem:[%s1 + $0x3c] sm:$0xf]
        %v310 = vld [vmem:[%s2] sm:$0xff]
        %v311 = vld [vmem:[%s2 + $0x8] sm:$0xff]
        %v312 = vld [vmem:[%s2 + $0x10] sm:$0xff]
        %v313 = vld [vmem:[%s2 + $0x18] sm:$0xff]
        %v314 = vld [vmem:[%s2 + $0x20] sm:$0xff]
        %v315 = vld [vmem:[%s2 + $0x28] sm:$0xff]
        %v316 = vld [vmem:[%s2 + $0x30] sm:$0xff]
        %v317 = vld [vmem:[%s2 + $0x38] sm:$0xff]
        %v318 = vld [vmem:[%s2 + $0x40] sm:$0xff]
        %v319 = vld [vmem:[%s2 + $0x48] sm:$0xff]
        %v320 = vld [vmem:[%s2 + $0x50] sm:$0xff]
        %v321 = vld [vmem:[%s2 + $0x58] sm:$0xff]
        %v322 = vld [vmem:[%s2 + $0x60] sm:$0xff]
        %v323 = vld [vmem:[%s2 + $0x68] sm:$0xff]
        %v324 = vld [vmem:[%s2 + $0x70] sm:$0xff]
        %v325 = vld [vmem:[%s2 + $0x78] sm:$0xff]
        %327 = vset.pattern.permute.xlu0 0
        %328 = vperm.xlu0 %327, %v310
        %v329 = vpop.permute.xlu0 %328
        %332 = vset.pattern.permute.xlu0 0
        %333 = vperm.xlu0 %332, %v311
        %v334 = vpop.permute.xlu0 %333
        %337 = vset.pattern.permute.xlu0 0
        %338 = vperm.xlu0 %337, %v312
        %v339 = vpop.permute.xlu0 %338
        %342 = vset.pattern.permute.xlu0 0
        %343 = vperm.xlu0 %342, %v313
        %v344 = vpop.permute.xlu0 %343
        %347 = vset.pattern.permute.xlu0 0
        %348 = vperm.xlu0 %347, %v314
        %v349 = vpop.permute.xlu0 %348
        %352 = vset.pattern.permute.xlu0 0
        %353 = vperm.xlu0 %352, %v315
        %v354 = vpop.permute.xlu0 %353
        %357 = vset.pattern.permute.xlu0 0
        %358 = vperm.xlu0 %357, %v316
        %v359 = vpop.permute.xlu0 %358
        %362 = vset.pattern.permute.xlu0 0
        %363 = vperm.xlu0 %362, %v317
        %v364 = vpop.permute.xlu0 %363
        %367 = vset.pattern.permute.xlu0 0
        %368 = vperm.xlu0 %367, %v318
        %v369 = vpop.permute.xlu0 %368
        %372 = vset.pattern.permute.xlu0 0
        %373 = vperm.xlu0 %372, %v319
        %v374 = vpop.permute.xlu0 %373
        %377 = vset.pattern.permute.xlu0 0
        %378 = vperm.xlu0 %377, %v320
        %v379 = vpop.permute.xlu0 %378
        %382 = vset.pattern.permute.xlu0 0
        %383 = vperm.xlu0 %382, %v321
        %v384 = vpop.permute.xlu0 %383
        %387 = vset.pattern.permute.xlu0 0
        %388 = vperm.xlu0 %387, %v322
        %v389 = vpop.permute.xlu0 %388
        %392 = vset.pattern.permute.xlu0 0
        %393 = vperm.xlu0 %392, %v323
        %v394 = vpop.permute.xlu0 %393
        %397 = vset.pattern.permute.xlu0 0
        %398 = vperm.xlu0 %397, %v324
        %v399 = vpop.permute.xlu0 %398
        %402 = vset.pattern.permute.xlu0 0
        %403 = vperm.xlu0 %402, %v325
        %v404 = vpop.permute.xlu0 %403
        %v422 = vunpack.c.l.b16 %v294
        %v423 = vunpack.c.l.b16 %v295
        %v424 = vunpack.c.l.b16 %v296
        %v425 = vunpack.c.l.b16 %v297
        %v426 = vunpack.c.l.b16 %v298
        %v427 = vunpack.c.l.b16 %v299
        %v428 = vunpack.c.l.b16 %v300
        %v429 = vunpack.c.l.b16 %v301
        %v430 = vunpack.c.l.b16 %v302
        %v431 = vunpack.c.l.b16 %v303
        %v432 = vunpack.c.l.b16 %v304
        %v433 = vunpack.c.l.b16 %v305
        %v434 = vunpack.c.l.b16 %v306
        %v435 = vunpack.c.l.b16 %v307
        %v436 = vunpack.c.l.b16 %v308
        %v437 = vunpack.c.l.b16 %v309
        %v438 = vpack.c.b16 %v423, %v422
        %v439 = vpack.c.b16 %v425, %v424
        %v440 = vpack.c.b16 %v427, %v426
        %v441 = vpack.c.b16 %v429, %v428
        %v442 = vpack.c.b16 %v431, %v430
        %v443 = vpack.c.b16 %v433, %v432
        %v444 = vpack.c.b16 %v435, %v434
        %v445 = vpack.c.b16 %v437, %v436
        %vm446 = vcmask 261120
        %v448 = vsel %vm446, %v438, 0
        %v451 = vsel %vm446, %v439, 0
        %v454 = vsel %vm446, %v440, 0
        %v457 = vsel %vm446, %v441, 0
        %v460 = vsel %vm446, %v442, 0
        %v463 = vsel %vm446, %v443, 0
        %v466 = vsel %vm446, %v444, 0
        %v469 = vsel %vm446, %v445, 0
        %471 = vmatprep.subr.bf16.mxu0 0
        %472 = vmatpush1.bf16.msra.mxu0 %v292
        %473 = vmatprep.subr.bf16.mxu0 0
        %474 = vmatpush1.bf16.msra.mxu0 %v293
        %475 = vmatprep.subr.bf16.mxu0 0
        %476 = vmatpush1.bf16.msra.mxu0 0
        %477 = vmatprep.subr.bf16.mxu0 0
        %478 = vmatpush1.bf16.msra.mxu0 0
        %479 = vmatprep.subr.bf16.mxu0 0
        %480 = vmatpush1.bf16.msra.mxu0 0
        %481 = vmatprep.subr.bf16.mxu0 0
        %482 = vmatpush1.bf16.msra.mxu0 0
        %483 = vmatprep.subr.bf16.mxu0 0
        %484 = vmatpush1.bf16.msra.mxu0 0
        %485 = vmatprep.subr.bf16.mxu0 0
        %486 = vmatpush1.bf16.msra.mxu0 0
        %487 = vmatprep.subr.bf16.mxu0 0
        %488 = vmatpush1.bf16.msra.mxu0 0
        %489 = vmatprep.subr.bf16.mxu0 0
        %490 = vmatpush1.bf16.msra.mxu0 0
        %491 = vmatprep.subr.bf16.mxu0 0
        %492 = vmatpush1.bf16.msra.mxu0 0
        %493 = vmatprep.subr.bf16.mxu0 0
        %494 = vmatpush1.bf16.msra.mxu0 0
        %495 = vmatprep.subr.bf16.mxu0 0
        %496 = vmatpush1.bf16.msra.mxu0 0
        %497 = vmatprep.subr.bf16.mxu0 0
        %498 = vmatpush1.bf16.msra.mxu0 0
        %499 = vmatprep.subr.bf16.mxu0 0
        %500 = vmatpush1.bf16.msra.mxu0 0
        %501 = vmatprep.subr.bf16.mxu0 0
        %502 = vmatpush1.bf16.msra.mxu0 0
        %503 = vmatprep.mubr.bf16.mxu0 0
        %504 = vmatmul.mubr.bf16.gmra.mrb[0].mxu0 %v448
        %v505 = vpop.f32.mrb[0].mxu0
        %v506 = vadd.f32 %v329, %v505
        %v507 = vpop.f32.mrb[0].mxu0
        %v508 = vpop.f32.mrb[0].mxu0
        %v509 = vadd.f32 %v334, %v508
        %v510 = vpop.f32.mrb[0].mxu0
        %511 = vmatprep.mubr.bf16.mxu0 0
        %512 = vmatmul.mubr.bf16.gmra.mrb[0].mxu0 %v451
        %v513 = vpop.f32.mrb[0].mxu0
        %v514 = vadd.f32 %v339, %v513
        %v515 = vpop.f32.mrb[0].mxu0
        %v516 = vpop.f32.mrb[0].mxu0
        %v517 = vadd.f32 %v344, %v516
        %v518 = vpop.f32.mrb[0].mxu0
        %519 = vmatprep.mubr.bf16.mxu0 0
        %520 = vmatmul.mubr.bf16.gmra.mrb[0].mxu0 %v454
        %v521 = vpop.f32.mrb[0].mxu0
        %v522 = vadd.f32 %v349, %v521
        %v523 = vpop.f32.mrb[0].mxu0
        %v524 = vpop.f32.mrb[0].mxu0
        %v525 = vadd.f32 %v354, %v524
        %v526 = vpop.f32.mrb[0].mxu0
        %527 = vmatprep.mubr.bf16.mxu0 0
        %528 = vmatmul.mubr.bf16.gmra.mrb[0].mxu0 %v457
        %v529 = vpop.f32.mrb[0].mxu0
        %v530 = vadd.f32 %v359, %v529
        %v531 = vpop.f32.mrb[0].mxu0
        %v532 = vpop.f32.mrb[0].mxu0
        %v533 = vadd.f32 %v364, %v532
        %v534 = vpop.f32.mrb[0].mxu0
        %535 = vmatprep.mubr.bf16.mxu0 0
        %536 = vmatmul.mubr.bf16.gmra.mrb[0].mxu0 %v460
        %v537 = vpop.f32.mrb[0].mxu0
        %v538 = vadd.f32 %v369, %v537
        %v539 = vpop.f32.mrb[0].mxu0
        %v540 = vpop.f32.mrb[0].mxu0
        %v541 = vadd.f32 %v374, %v540
        %v542 = vpop.f32.mrb[0].mxu0
        %543 = vmatprep.mubr.bf16.mxu0 0
        %544 = vmatmul.mubr.bf16.gmra.mrb[0].mxu0 %v463
        %v545 = vpop.f32.mrb[0].mxu0
        %v546 = vadd.f32 %v379, %v545
        %v547 = vpop.f32.mrb[0].mxu0
        %v548 = vpop.f32.mrb[0].mxu0
        %v549 = vadd.f32 %v384, %v548
        %v550 = vpop.f32.mrb[0].mxu0
        %551 = vmatprep.mubr.bf16.mxu0 0
        %552 = vmatmul.mubr.bf16.gmra.mrb[0].mxu0 %v466
        %v553 = vpop.f32.mrb[0].mxu0
        %v554 = vadd.f32 %v389, %v553
        %v555 = vpop.f32.mrb[0].mxu0
        %v556 = vpop.f32.mrb[0].mxu0
        %v557 = vadd.f32 %v394, %v556
        %v558 = vpop.f32.mrb[0].mxu0
        %559 = vmatprep.mubr.bf16.mxu0 0
        %560 = vmatmul.mubr.bf16.gmra.mrb[0].mxu0 %v469
        %v561 = vpop.f32.mrb[0].mxu0
        %v562 = vadd.f32 %v399, %v561
        %v563 = vpop.f32.mrb[0].mxu0
        %v564 = vpop.f32.mrb[0].mxu0
        %v565 = vadd.f32 %v404, %v564
        %v566 = vpop.f32.mrb[0].mxu0
        %567 = vdwg.mxu0
        %v568 = vmul.f32 %v506, %v506
        %v569 = vmul.f32 %v509, %v509
        %v570 = vmul.f32 %v514, %v514
        %v571 = vmul.f32 %v517, %v517
        %v572 = vmul.f32 %v522, %v522
        %v573 = vmul.f32 %v525, %v525
        %v574 = vmul.f32 %v530, %v530
        %v575 = vmul.f32 %v533, %v533
        %v576 = vmul.f32 %v538, %v538
        %v577 = vmul.f32 %v541, %v541
        %v578 = vmul.f32 %v546, %v546
        %v579 = vmul.f32 %v549, %v549
        %v580 = vmul.f32 %v554, %v554
        %v581 = vmul.f32 %v557, %v557
        %v582 = vmul.f32 %v562, %v562
        %v583 = vmul.f32 %v565, %v565
        %v584 = vmul.f32 %v506, %v568
        %v585 = vmul.f32 %v509, %v569
        %v586 = vmul.f32 %v514, %v570
        %v587 = vmul.f32 %v517, %v571
        %v588 = vmul.f32 %v522, %v572
        %v589 = vmul.f32 %v525, %v573
        %v590 = vmul.f32 %v530, %v574
        %v591 = vmul.f32 %v533, %v575
        %v592 = vmul.f32 %v538, %v576
        %v593 = vmul.f32 %v541, %v577
        %v594 = vmul.f32 %v546, %v578
        %v595 = vmul.f32 %v549, %v579
        %v596 = vmul.f32 %v554, %v580
        %v597 = vmul.f32 %v557, %v581
        %v598 = vmul.f32 %v562, %v582
        %v599 = vmul.f32 %v565, %v583
        %v600 = vmul.f32 %v584, 0.044715
        %v601 = vmul.f32 %v585, 0.044715
        %v602 = vmul.f32 %v586, 0.044715
        %v603 = vmul.f32 %v587, 0.044715
        %v604 = vmul.f32 %v588, 0.044715
        %v605 = vmul.f32 %v589, 0.044715
        %v606 = vmul.f32 %v590, 0.044715
        %v607 = vmul.f32 %v591, 0.044715
        %v608 = vmul.f32 %v592, 0.044715
        %v609 = vmul.f32 %v593, 0.044715
        %v610 = vmul.f32 %v594, 0.044715
        %v611 = vmul.f32 %v595, 0.044715
        %v612 = vmul.f32 %v596, 0.044715
        %v613 = vmul.f32 %v597, 0.044715
        %v614 = vmul.f32 %v598, 0.044715
        %v615 = vmul.f32 %v599, 0.044715
        %v616 = vadd.f32 %v506, %v600
        %v617 = vadd.f32 %v509, %v601
        %v618 = vadd.f32 %v514, %v602
        %v619 = vadd.f32 %v517, %v603
        %v620 = vadd.f32 %v522, %v604
        %v621 = vadd.f32 %v525, %v605
        %v622 = vadd.f32 %v530, %v606
        %v623 = vadd.f32 %v533, %v607
        %v624 = vadd.f32 %v538, %v608
        %v625 = vadd.f32 %v541, %v609
        %v626 = vadd.f32 %v546, %v610
        %v627 = vadd.f32 %v549, %v611
        %v628 = vadd.f32 %v554, %v612
        %v629 = vadd.f32 %v557, %v613
        %v630 = vadd.f32 %v562, %v614
        %v631 = vadd.f32 %v565, %v615
        %v632 = vmul.f32 %v616, 0.7978846
        %v633 = vmul.f32 %v617, 0.7978846
        %v634 = vmul.f32 %v618, 0.7978846
        %v635 = vmul.f32 %v619, 0.7978846
        %v636 = vmul.f32 %v620, 0.7978846
        %v637 = vmul.f32 %v621, 0.7978846
        %v638 = vmul.f32 %v622, 0.7978846
        %v639 = vmul.f32 %v623, 0.7978846
        %v640 = vmul.f32 %v624, 0.7978846
        %v641 = vmul.f32 %v625, 0.7978846
        %v642 = vmul.f32 %v626, 0.7978846
        %v643 = vmul.f32 %v627, 0.7978846
        %v644 = vmul.f32 %v628, 0.7978846
        %v645 = vmul.f32 %v629, 0.7978846
        %v646 = vmul.f32 %v630, 0.7978846
        %v647 = vmul.f32 %v631, 0.7978846
        %v648 = vtanh.pop %v632
        %v649 = vtanh.pop %v633
        %v650 = vtanh.pop %v634
        %v651 = vtanh.pop %v635
        %v652 = vtanh.pop %v636
        %v653 = vtanh.pop %v637
        %v654 = vtanh.pop %v638
        %v655 = vtanh.pop %v639
        %v656 = vtanh.pop %v640
        %v657 = vtanh.pop %v641
        %v658 = vtanh.pop %v642
        %v659 = vtanh.pop %v643
        %v660 = vtanh.pop %v644
        %v661 = vtanh.pop %v645
        %v662 = vtanh.pop %v646
        %v663 = vtanh.pop %v647
        %v664 = vadd.f32 %v648, 1.0
        %v665 = vadd.f32 %v649, 1.0
        %v666 = vadd.f32 %v650, 1.0
        %v667 = vadd.f32 %v651, 1.0
        %v668 = vadd.f32 %v652, 1.0
        %v669 = vadd.f32 %v653, 1.0
        %v670 = vadd.f32 %v654, 1.0
        %v671 = vadd.f32 %v655, 1.0
        %v672 = vadd.f32 %v656, 1.0
        %v673 = vadd.f32 %v657, 1.0
        %v674 = vadd.f32 %v658, 1.0
        %v675 = vadd.f32 %v659, 1.0
        %v676 = vadd.f32 %v660, 1.0
        %v677 = vadd.f32 %v661, 1.0
        %v678 = vadd.f32 %v662, 1.0
        %v679 = vadd.f32 %v663, 1.0
        %v680 = vmul.f32 %v664, 0.5
        %v681 = vmul.f32 %v665, 0.5
        %v682 = vmul.f32 %v666, 0.5
        %v683 = vmul.f32 %v667, 0.5
        %v684 = vmul.f32 %v668, 0.5
        %v685 = vmul.f32 %v669, 0.5
        %v686 = vmul.f32 %v670, 0.5
        %v687 = vmul.f32 %v671, 0.5
        %v688 = vmul.f32 %v672, 0.5
        %v689 = vmul.f32 %v673, 0.5
        %v690 = vmul.f32 %v674, 0.5
        %v691 = vmul.f32 %v675, 0.5
        %v692 = vmul.f32 %v676, 0.5
        %v693 = vmul.f32 %v677, 0.5
        %v694 = vmul.f32 %v678, 0.5
        %v695 = vmul.f32 %v679, 0.5
        %v696 = vmul.f32 %v506, %v680
        %v697 = vmul.f32 %v509, %v681
        %v698 = vmul.f32 %v514, %v682
        %v699 = vmul.f32 %v517, %v683
        %v700 = vmul.f32 %v522, %v684
        %v701 = vmul.f32 %v525, %v685
        %v702 = vmul.f32 %v530, %v686
        %v703 = vmul.f32 %v533, %v687
        %v704 = vmul.f32 %v538, %v688
        %v705 = vmul.f32 %v541, %v689
        %v706 = vmul.f32 %v546, %v690
        %v707 = vmul.f32 %v549, %v691
        %v708 = vmul.f32 %v554, %v692
        %v709 = vmul.f32 %v557, %v693
        %v710 = vmul.f32 %v562, %v694
        %v711 = vmul.f32 %v565, %v695
        %v712 = vld [vmem:[%s3] sm:$0xf]
        %v713 = vld [vmem:[%s3 + $0x4] sm:$0xf]
        %v714 = vld [vmem:[%s3 + $0x8] sm:$0xf]
        %v715 = vld [vmem:[%s3 + $0xc] sm:$0xf]
        %v716 = vpack.c.bf16 %v697, %v696
        %v717 = vpack.c.bf16 %v699, %v698
        %v718 = vpack.c.bf16 %v701, %v700
        %v719 = vpack.c.bf16 %v703, %v702
        %v720 = vpack.c.bf16 %v705, %v704
        %v721 = vpack.c.bf16 %v707, %v706
        %v722 = vpack.c.bf16 %v709, %v708
        %v723 = vpack.c.bf16 %v711, %v710
        %v724 = vld [vmem:[%s4] sm:$0xff]
        %v725 = vld [vmem:[%s4 + $0x8] sm:$0xff]
        %v726 = vld [vmem:[%s4 + $0x10] sm:$0xff]
        %v727 = vld [vmem:[%s4 + $0x18] sm:$0xff]
        %729 = vset.pattern.permute.xlu0 0
        %730 = vperm.xlu0 %729, %v724
        %v731 = vpop.permute.xlu0 %730
        %734 = vset.pattern.permute.xlu0 0
        %735 = vperm.xlu0 %734, %v725
        %v736 = vpop.permute.xlu0 %735
        %739 = vset.pattern.permute.xlu0 0
        %740 = vperm.xlu0 %739, %v726
        %v741 = vpop.permute.xlu0 %740
        %744 = vset.pattern.permute.xlu0 0
        %745 = vperm.xlu0 %744, %v727
        %v746 = vpop.permute.xlu0 %745
        %v752 = vunpack.c.l.b16 %v712
        %v753 = vunpack.c.l.b16 %v713
        %v754 = vunpack.c.l.b16 %v714
        %v755 = vunpack.c.l.b16 %v715
        %v756 = vpack.c.b16 %v753, %v752
        %v757 = vpack.c.b16 %v755, %v754
        %760 = vmatprep.subr.bf16.mxu0 0
        %761 = vmatpush1.bf16.msra.mxu0 %v716
        %762 = vmatprep.subr.bf16.mxu0 0
        %763 = vmatpush1.bf16.msra.mxu0 %v717
        %764 = vmatprep.subr.bf16.mxu0 0
        %765 = vmatpush1.bf16.msra.mxu0 %v718
        %766 = vmatprep.subr.bf16.mxu0 0
        %767 = vmatpush1.bf16.msra.mxu0 %v719
        %768 = vmatprep.subr.bf16.mxu0 0
        %769 = vmatpush1.bf16.msra.mxu0 %v720
        %770 = vmatprep.subr.bf16.mxu0 0
        %771 = vmatpush1.bf16.msra.mxu0 %v721
        %772 = vmatprep.subr.bf16.mxu0 0
        %773 = vmatpush1.bf16.msra.mxu0 %v722
        %774 = vmatprep.subr.bf16.mxu0 0
        %775 = vmatpush1.bf16.msra.mxu0 %v723
        %776 = vmatprep.subr.bf16.mxu0 0
        %777 = vmatpush1.bf16.msra.mxu0 0
        %778 = vmatprep.subr.bf16.mxu0 0
        %779 = vmatpush1.bf16.msra.mxu0 0
        %780 = vmatprep.subr.bf16.mxu0 0
        %781 = vmatpush1.bf16.msra.mxu0 0
        %782 = vmatprep.subr.bf16.mxu0 0
        %783 = vmatpush1.bf16.msra.mxu0 0
        %784 = vmatprep.subr.bf16.mxu0 0
        %785 = vmatpush1.bf16.msra.mxu0 0
        %786 = vmatprep.subr.bf16.mxu0 0
        %787 = vmatpush1.bf16.msra.mxu0 0
        %788 = vmatprep.subr.bf16.mxu0 0
        %789 = vmatpush1.bf16.msra.mxu0 0
        %790 = vmatprep.subr.bf16.mxu0 0
        %791 = vmatpush1.bf16.msra.mxu0 0
        %792 = vmatprep.mubr.bf16.mxu0 0
        %793 = vmatmul.mubr.bf16.gmra.mrb[0].mxu0 %v756
        %v794 = vpop.f32.mrb[0].mxu0
        %v795 = vadd.f32 %v731, %v794
        %v796 = vpop.f32.mrb[0].mxu0
        %v797 = vpop.f32.mrb[0].mxu0
        %v798 = vadd.f32 %v736, %v797
        %v799 = vpop.f32.mrb[0].mxu0
        %800 = vmatprep.mubr.bf16.mxu0 0
        %801 = vmatmul.mubr.bf16.gmra.mrb[0].mxu0 %v757
        %v802 = vpop.f32.mrb[0].mxu0
        %v803 = vadd.f32 %v741, %v802
        %v804 = vpop.f32.mrb[0].mxu0
        %v805 = vpop.f32.mrb[0].mxu0
        %v806 = vadd.f32 %v746, %v805
        %v807 = vpop.f32.mrb[0].mxu0
        %808 = vdwg.mxu0
        %809 = vst [vmem:[%s286] sm:$0xff] %v795
        %810 = vst [vmem:[%s286 + $0x8] sm:$0xff] %v798
        %811 = vst [vmem:[%s286 + $0x10] sm:$0xff] %v803
        %812 = vst [vmem:[%s286 + $0x18] sm:$0xff] %v806
        %s813 = sand.u32 %s153, 1
        %s814 = scalar_lea.sflag [#allocation4], %s813
        %s815 = sand.u32 %s153, 1
        %s816 = smul.addr %s815, 32
        %s817 = scalar_lea.vmem [#allocation3], %s816
        // Predicated region
        $region79: #{tpu_custom_call.1} parent=73 // pred_check
          %p818 = pneg %p163
        $region80: #{tpu_custom_call.1} parent=73 // pred_check_branch
          %820 = sbr.rel (%p818) target = $region82
        $region81: #{tpu_custom_call.1} parent=73 // pred_region
          %s822 = ssub.s32 512, 512
          %823 = vsyncadd %s814, %s822
          %s824 = smul.addr %s23, 8
          %s825 = sadd.s32 %s24, %s824
          %s826 = smul.addr %s825, 128
          %s827 = scalar_lea.hbm %s5, %s826
          %s828 = sshll.u32 %s817, 4
          %s829 = int_to_ptr.vmem [resolvable:$true] %s828
          %834 = dma.vmem_to_hbm [thread:$0]  %s829, 512, %s827, %s814, 128, 256, 8
        $region82: #{tpu_custom_call.1} parent=73 // pred_fallthru
          _
      $region74: #{tpu_custom_call.1} parent=5 // pred_fallthru
        _
      %p835 = scmp.le.s32.totalorder 2, %s14
      // Predicated region
      $region83: #{tpu_custom_call.1} parent=5 // pred_check
        %p836 = pneg %p835
      $region84: #{tpu_custom_call.1} parent=5 // pred_check_branch
        %838 = sbr.rel (%p836) target = $region86
      $region85: #{tpu_custom_call.1} parent=5 // pred_region
        %s839 = ssub.s32 %s14, 2
        // Predicated region
        $region87: #{tpu_custom_call.1} parent=85 // pred_check
          %p840 = pneg %p169
        $region88: #{tpu_custom_call.1} parent=85 // pred_check_branch
          %842 = sbr.rel (%p840) target = $region90
        $region89: #{tpu_custom_call.1} parent=85 // pred_region
          %s843 = sand.u32 %s154, 1
          %s844 = scalar_lea.sflag [#allocation4], %s843
          %s845 = sand.u32 %s154, 1
          %s846 = smul.addr %s845, 32
          %s847 = scalar_lea.vmem [#allocation3], %s846
          %848 = dma.done %s844, 512
        $region90: #{tpu_custom_call.1} parent=85 // pred_fallthru
          _
      $region86: #{tpu_custom_call.1} parent=5 // pred_fallthru
        _
    $region6: #{tpu_custom_call.1} parent=1 // loop_footer
      %s18 = sadd.s32 1, %s14
    $region7: #{tpu_custom_call.1} parent=1 // loop_footer_branch
      %13 = sbr.rel target = $region3
    $region8: #{tpu_custom_call.1} parent=1 // loop_exit
      _
    %849 = vsyncpa [#allocation4], 1
    %s850 = scalar_lea.sflag [#allocation4], 1
    %851 = vsyncpa %s850, 1

</llo_original>
